<compile_context>
chip_gen: v5e
topology: v5e:2x2
jax: 0.10.0
libtpu: 0.0.40
codegen_flags: <defaults>
</compile_context>

<pallas_src>
import jax
import jax.numpy as jnp
from jax.experimental import pallas as pl
from jax.experimental.pallas import tpu as pltpu


def _rnn_fused_kernel(xh_ref, p_ref, slab_ref):
    """Fused ReLU-RNN cell step + output Linear, 2 MXU pushes, f32 throughout.

    xh_ref  : (8, 2H)   f32  rows 0:B = [x | h0], rest zero-padded
    p_ref   : (Rp, 128) f32  packed parameter slab (see layout above)
    slab_ref: (8, 128)  f32  [out(O) | h_new(H) | zeros]
    """
    two_h = xh_ref.shape[1]
    h = two_h // 2
    r_b1 = ((3 * h + 7) // 8) * 8        # sublane-aligned row of (b_ih + b_hh)
    r_b2 = r_b1 + 8                      # sublane-aligned row of [b_fc | 0]

    # h_new = relu([x | h0] @ [W_ih^T ; W_hh^T] + (b_ih + b_hh))
    pre = jnp.dot(xh_ref[...], p_ref[0:two_h, 0:h],
                  preferred_element_type=jnp.float32)
    h_new = jnp.maximum(pre + p_ref[r_b1:r_b1 + 1, 0:h], 0.0)

    # slab = h_new @ [W_fc^T | I_H | 0] + [b_fc | 0]  ->  [out | h_new | 0]
    slab_ref[...] = (
        jnp.dot(h_new, p_ref[two_h:3 * h, :], preferred_element_type=jnp.float32)
        + p_ref[r_b2:r_b2 + 1, :])


def pack_params(params):
    """One-time packing of all weights & biases into a single f32 (Rp, 128) slab."""
    H = params["w_ih"].shape[0]
    O = params["w_fc"].shape[0]
    LANES = 128
    assert H % 8 == 0 and O + H <= LANES, "packed-slab layout assumes H%8==0, O+H<=128"

    r_b1 = ((3 * H + 7) // 8) * 8
    r_b2 = r_b1 + 8
    rows = r_b2 + 8

    p = jnp.zeros((rows, LANES), jnp.float32)
    p = p.at[0:H, 0:H].set(params["w_ih"].T.astype(jnp.float32))
    p = p.at[H:2 * H, 0:H].set(params["w_hh"].T.astype(jnp.float32))
    p = p.at[2 * H:3 * H, 0:O].set(params["w_fc"].T.astype(jnp.float32))
    p = p.at[2 * H:3 * H, O:O + H].set(jnp.eye(H, dtype=jnp.float32))
    p = p.at[r_b1, 0:H].set((params["b_ih"] + params["b_hh"]).astype(jnp.float32))
    p = p.at[r_b2, 0:O].set(params["b_fc"].astype(jnp.float32))
    return {"p": p, "H": H, "O": O}


def rnn_forward(input_data, hidden, packed):
    """Mirror of RNN.forward for model_type='rnn', n_layers=1.

    input_data: (B, hidden_size)  (anything reshapeable to (1, B, hidden_size))
    hidden:     (1, B, hidden_size)
    returns (output (B, output_size), hidden (1, B, hidden_size))
    """
    H, O = packed["H"], packed["O"]
    B = input_data.shape[0]
    B_PAD = 8  # full sublane tile -> unmasked loads/stores

    assert input_data.size == B * H, (
        "input_data feature dim must equal hidden_size for the nn.RNN(H, H) cell")
    assert B <= B_PAD

    x = input_data.reshape(B, H).astype(jnp.float32)
    h0 = hidden.reshape(B, H).astype(jnp.float32)
    # Activation packing happens in the wrapper (layout plumbing, not kernel work).
    xh = jnp.pad(jnp.concatenate([x, h0], axis=-1), ((0, B_PAD - B), (0, 0)))

    vmem = lambda: pl.BlockSpec(memory_space=pltpu.VMEM)
    slab = pl.pallas_call(
        _rnn_fused_kernel,
        out_shape=jax.ShapeDtypeStruct((B_PAD, 128), jnp.float32),
        in_specs=[vmem(), vmem()],
        out_specs=vmem(),
    )(xh, packed["p"])

    out = slab[:B, :O]
    h_new = slab[:B, O:O + H].reshape(1, B, H)
    return out, h_new


def init_params(key, input_size, hidden_size, output_size):
    # Deterministic synthetic init (PyTorch uses uniform(-1/sqrt(H), 1/sqrt(H))).
    ks = jax.random.split(key, 6)
    bound = 1.0 / jnp.sqrt(hidden_size)
    u = lambda k, shape: jax.random.uniform(k, shape, jnp.float32, -bound, bound)
    return {
        # nn.RNN(hidden_size, hidden_size): weight_ih_l0 (H, H), weight_hh_l0 (H, H)
        "w_ih": u(ks[0], (hidden_size, hidden_size)),
        "w_hh": u(ks[1], (hidden_size, hidden_size)),
        "b_ih": u(ks[2], (hidden_size,)),
        "b_hh": u(ks[3], (hidden_size,)),
        # nn.Linear(hidden_size, output_size): (O, H)
        "w_fc": u(ks[4], (output_size, hidden_size)),
        "b_fc": u(ks[5], (output_size,)),
    }


def reference_forward(input_data, hidden, params):
    # Pure-JAX f32 reference matching PyTorch module semantics.
    B = input_data.shape[0]
    H = params["w_ih"].shape[0]
    x = input_data.reshape(B, H)
    h0 = hidden.reshape(B, H)
    h_new = jnp.maximum(
        x @ params["w_ih"].T + params["b_ih"]
        + h0 @ params["w_hh"].T + params["b_hh"], 0.0)
    out = h_new @ params["w_fc"].T + params["b_fc"]
    return out, h_new.reshape(1, B, H)


if __name__ == "__main__":
    input_size = 32   # unused by forward (the nn.RNN cell consumes hidden_size features)
    hidden_size = 32
    output_size = 8
    batch = 2
    n_layers = 1

    key = jax.random.PRNGKey(0)
    kx, kp = jax.random.split(key)

    params = init_params(kp, input_size, hidden_size, output_size)
    packed = pack_params(params)   # one-time packing: single parameter DMA per call

    # input_data such that input_data.reshape(1, B, -1) has feature dim == hidden_size
    x = jax.random.normal(kx, (batch, hidden_size), jnp.float32)
    hidden = jnp.zeros((n_layers, batch, hidden_size), jnp.float32)  # init_hidden

    out, h_new = rnn_forward(x, hidden, packed)
    out = jax.block_until_ready(out)
    h_new = jax.block_until_ready(h_new)

    out_ref, h_ref = reference_forward(x, hidden, params)
    assert out.shape == (batch, output_size)
    assert h_new.shape == (n_layers, batch, hidden_size)
    # f32 end-to-end; tolerance only needs to cover MXU f32 pass decomposition.
    assert jnp.allclose(out, out_ref, atol=1e-2, rtol=1e-2)
    assert jnp.allclose(h_new, h_ref, atol=1e-2, rtol=1e-2)

    # TODO(synk): model_type='lstm' branch (nn.LSTM) not implemented; default 'rnn' path only.
    print("KERNEL_OK")
</pallas_src>

<mosaic_0001>
module attributes {stable_mosaic.version = 11 : i64} {
  func.func @_rnn_fused_kernel(%arg0: memref<8x64xf32, #tpu.memory_space<vmem>>, %arg1: memref<112x128xf32, #tpu.memory_space<vmem>>, %arg2: memref<8x128xf32, #tpu.memory_space<vmem>>) attributes {dimension_semantics = [], scalar_prefetch = 0 : i64, scratch_operands = 0 : i64, tpu.core_type = #tpu.core_type<tc>} {
    %c0 = arith.constant 0 : index
    %c0_0 = arith.constant 0 : index
    %0 = vector.load %arg0[%c0, %c0_0] : memref<8x64xf32, #tpu.memory_space<vmem>>, vector<8x64xf32>
    %c0_1 = arith.constant 0 : index
    %c0_2 = arith.constant 0 : index
    %1 = vector.load %arg1[%c0_1, %c0_2] : memref<112x128xf32, #tpu.memory_space<vmem>>, vector<64x32xf32>
    %cst = arith.constant dense<0.000000e+00> : vector<8x32xf32>
    %2 = tpu.matmul %0, %1, %cst {dimension_numbers = #tpu.dot_dimension_numbers<[1], [0], [0], [1], [0, 0, 1, 1], [], []>} : vector<8x64xf32>, vector<64x32xf32>, vector<8x32xf32> -> vector<8x32xf32>
    %c96 = arith.constant 96 : index
    %c0_3 = arith.constant 0 : index
    %3 = vector.load %arg1[%c96, %c0_3] : memref<112x128xf32, #tpu.memory_space<vmem>>, vector<1x32xf32>
    %4 = vector.broadcast %3 : vector<1x32xf32> to vector<8x32xf32>
    %5 = arith.addf %2, %4 : vector<8x32xf32>
    %cst_4 = arith.constant 0.000000e+00 : f32
    %6 = vector.broadcast %cst_4 : f32 to vector<8x32xf32>
    %7 = arith.maximumf %5, %6 : vector<8x32xf32>
    %c64 = arith.constant 64 : index
    %c0_5 = arith.constant 0 : index
    %8 = vector.load %arg1[%c64, %c0_5] : memref<112x128xf32, #tpu.memory_space<vmem>>, vector<32x128xf32>
    %cst_6 = arith.constant dense<0.000000e+00> : vector<8x128xf32>
    %9 = tpu.matmul %7, %8, %cst_6 {dimension_numbers = #tpu.dot_dimension_numbers<[1], [0], [0], [1], [0, 0, 1, 1], [], []>} : vector<8x32xf32>, vector<32x128xf32>, vector<8x128xf32> -> vector<8x128xf32>
    %c104 = arith.constant 104 : index
    %c0_7 = arith.constant 0 : index
    %10 = vector.load %arg1[%c104, %c0_7] : memref<112x128xf32, #tpu.memory_space<vmem>>, vector<1x128xf32>
    %11 = vector.broadcast %10 : vector<1x128xf32> to vector<8x128xf32>
    %12 = arith.addf %9, %11 : vector<8x128xf32>
    %c0_8 = arith.constant 0 : index
    %c0_9 = arith.constant 0 : index
    %13 = vector.load %arg2[%c0_8, %c0_9] : memref<8x128xf32, #tpu.memory_space<vmem>>, vector<8x128xf32>
    tpu.vector_store %arg2[%c0_8, %c0_9], %12 {strides = array<i32>} : memref<8x128xf32, #tpu.memory_space<vmem>>, vector<8x128xf32>,
    return
  }
}

</mosaic_0001>

<llo_original>
// kernel: tpu_custom_call.1
$region0: #{tpu_custom_call.1}
  #allocation0 [shape = 'u32[]', space=smem, size = 0x4, offset = 0x4, fixed_abs, tag = 'smem constant byte address 0x4 - core index']
  #allocation1 [shape = 'u32[72,128]{1,0:T(1,128)}', space=vmem, size = 0x9000, scoped, tag = 'internal scratch']
  %s0 = inlined_call_operand.hbm [shape: f32[8,64], index: 0, kind: input, shape index: {}]
  %s1 = inlined_call_operand.hbm [shape: f32[112,128], index: 1, kind: input, shape index: {}]
  %s2 = inlined_call_operand.hbm [shape: f32[8,128], index: 2, kind: output, shape index: {}]
  %s3 = sld [smem:[#allocation0]]
  $region26: #{tpu_custom_call.1} parent=0
    _
  %s5 = ssub.s32 1, %s3
  %s6 = scalar_select 0, %s5, %s3
  $region1: #{tpu_custom_call.1} parent=0
    #allocation2 [shape = 'u8[4096]{0}', space=vmem, size = 0x1000, scoped, tag = 'input window, operand 0, single buffered']
    #allocation3 [shape = 's32[1]{0}', space=sflag, size = 0x4, scoped, tag = 'scoped memory for tpu_custom_call.1']
    #allocation4 [shape = 's32[1]{0}', space=sflag, size = 0x4, scoped, tag = 'scoped memory for tpu_custom_call.1']
    #allocation5 [shape = 'u8[57344]{0}', space=vmem, size = 0xe000, scoped, tag = 'input window, operand 1, single buffered']
    #allocation6 [shape = 's32[1]{0}', space=sflag, size = 0x4, scoped, tag = 'scoped memory for tpu_custom_call.1']
    #allocation7 [shape = 'u8[4096]{0}', space=vmem, size = 0x1000, scoped, tag = 'output window, operand 0, single buffered']
    %7 = vsyncpa [#allocation3], 0
    %8 = vsyncpa [#allocation6], 0
    %9 = vsyncpa [#allocation4], 0
    // Predicated region
    $region2: #{tpu_custom_call.1} parent=1 // pred_check
      _
    $region3: #{tpu_custom_call.1} parent=1 // pred_check_branch
      %11 = sbr.rel (0) target = $region5
    $region4: #{tpu_custom_call.1} parent=1 // pred_region
      %13 = vsyncadd [#allocation3], 0
      %s15 = sshll.u32 %s0, 4
      %s16 = int_to_ptr.hbm [resolvable:$true] %s15
      %s17 = sshll.u32 [#allocation2], 4
      %s18 = int_to_ptr.vmem [resolvable:$true] %s17
      %20 = dma.hbm_to_vmem [thread:$0]  %s16, 128, %s18, [#allocation3]
    $region5: #{tpu_custom_call.1} parent=1 // pred_fallthru
      _
    // Predicated region
    $region6: #{tpu_custom_call.1} parent=1 // pred_check
      _
    $region7: #{tpu_custom_call.1} parent=1 // pred_check_branch
      %22 = sbr.rel (0) target = $region9
    $region8: #{tpu_custom_call.1} parent=1 // pred_region
      %24 = vsyncadd [#allocation6], 0
      %s25 = sshll.u32 %s1, 4
      %s26 = int_to_ptr.hbm [resolvable:$true] %s25
      %s27 = sshll.u32 [#allocation5], 4
      %s28 = int_to_ptr.vmem [resolvable:$true] %s27
      %33 = dma.hbm_to_vmem [thread:$0]  %s26, 1792, %s28, [#allocation6], 128, 128, 8
    $region9: #{tpu_custom_call.1} parent=1 // pred_fallthru
      _
    // Predicated region
    $region10: #{tpu_custom_call.1} parent=1 // pred_check
      _
    $region11: #{tpu_custom_call.1} parent=1 // pred_check_branch
      %35 = sbr.rel (0) target = $region13
    $region12: #{tpu_custom_call.1} parent=1 // pred_region
      %37 = dma.done [#allocation3], 128
    $region13: #{tpu_custom_call.1} parent=1 // pred_fallthru
      _
    // Predicated region
    $region14: #{tpu_custom_call.1} parent=1 // pred_check
      _
    $region15: #{tpu_custom_call.1} parent=1 // pred_check_branch
      %39 = sbr.rel (0) target = $region17
    $region16: #{tpu_custom_call.1} parent=1 // pred_region
      %41 = dma.done [#allocation6], 1792
    $region17: #{tpu_custom_call.1} parent=1 // pred_fallthru
      _
    %v42 = vld [vmem:[#allocation2] sm:$0xff]
    %v43 = vld [vmem:[#allocation5] sm:$0xff]
    %v44 = vld [vmem:[#allocation5 + $0x8] sm:$0xff]
    %v45 = vld [vmem:[#allocation5 + $0x10] sm:$0xff]
    %v46 = vld [vmem:[#allocation5 + $0x18] sm:$0xff]
    %v47 = vld [vmem:[#allocation5 + $0x20] sm:$0xff]
    %v48 = vld [vmem:[#allocation5 + $0x28] sm:$0xff]
    %v49 = vld [vmem:[#allocation5 + $0x30] sm:$0xff]
    %v50 = vld [vmem:[#allocation5 + $0x38] sm:$0xff]
    %v51 = vld [vmem:[#allocation5 + $0x60] sm:$0x1]
    %v52 = vperm.slane %v51, 0
    %vm53 = vcmask 523264
    %v55 = vsel %vm53, %v42, 0
    %57 = vmatpush.msra.mxu0 0.0
    %58 = vmatpush.msra.mxu0 0.0
    %59 = vmatpush.msra.mxu0 0.0
    %60 = vmatpush.msra.mxu0 0.0
    %61 = vmatpush.msra.mxu0 0.0
    %62 = vmatpush.msra.mxu0 0.0
    %63 = vmatpush.msra.mxu0 0.0
    %64 = vmatpush.msra.mxu0 0.0
    %65 = vmatpush.msra.mxu0 %v50
    %66 = vmatpush.msra.mxu0 %v49
    %67 = vmatpush.msra.mxu0 %v48
    %68 = vmatpush.msra.mxu0 %v47
    %69 = vmatpush.msra.mxu0 %v46
    %70 = vmatpush.msra.mxu0 %v45
    %71 = vmatpush.msra.mxu0 %v44
    %72 = vmatpush.msra.mxu0 %v43
    %73 = vmatmul.f32.gmra.mxu0 %v55
    %v74 = vpop.f32.mrf.mxu0
    %v75 = vadd.f32 %v52, %v74
    %76 = vdwg.mxu0
    %v77 = vmax.f32 %v75, 0.0
    %v78 = vld [vmem:[#allocation5 + $0x40] sm:$0xff]
    %v79 = vld [vmem:[#allocation5 + $0x48] sm:$0xff]
    %v80 = vld [vmem:[#allocation5 + $0x50] sm:$0xff]
    %v81 = vld [vmem:[#allocation5 + $0x58] sm:$0xff]
    %v82 = vld [vmem:[#allocation5 + $0x68] sm:$0x1]
    %v83 = vperm.slane %v82, 0
    %vm84 = vcmask 261120
    %v86 = vsel %vm84, %v77, 0
    %88 = vmatpush.msra.mxu0 0.0
    %89 = vmatpush.msra.mxu0 0.0
    %90 = vmatpush.msra.mxu0 0.0
    %91 = vmatpush.msra.mxu0 0.0
    %92 = vmatpush.msra.mxu0 0.0
    %93 = vmatpush.msra.mxu0 0.0
    %94 = vmatpush.msra.mxu0 0.0
    %95 = vmatpush.msra.mxu0 0.0
    %96 = vmatpush.msra.mxu0 0.0
    %97 = vmatpush.msra.mxu0 0.0
    %98 = vmatpush.msra.mxu0 0.0
    %99 = vmatpush.msra.mxu0 0.0
    %100 = vmatpush.msra.mxu0 %v81
    %101 = vmatpush.msra.mxu0 %v80
    %102 = vmatpush.msra.mxu0 %v79
    %103 = vmatpush.msra.mxu0 %v78
    %104 = vmatmul.f32.gmra.mxu0 %v86
    %v105 = vpop.f32.mrf.mxu0
    %v106 = vadd.f32 %v83, %v105
    %107 = vdwg.mxu0
    %108 = vst [vmem:[#allocation7] sm:$0xff] %v106
    // Predicated region
    $region18: #{tpu_custom_call.1} parent=1 // pred_check
      _
    $region19: #{tpu_custom_call.1} parent=1 // pred_check_branch
      %110 = sbr.rel (0) target = $region21
    $region20: #{tpu_custom_call.1} parent=1 // pred_region
      %112 = vsyncadd [#allocation4], 0
      %s114 = sshll.u32 [#allocation7], 4
      %s115 = int_to_ptr.vmem [resolvable:$true] %s114
      %s116 = sshll.u32 %s2, 4
      %s117 = int_to_ptr.hbm [resolvable:$true] %s116
      %119 = dma.vmem_to_hbm [thread:$0]  %s115, 128, %s117, [#allocation4]
    $region21: #{tpu_custom_call.1} parent=1 // pred_fallthru
      _
    // Predicated region
    $region22: #{tpu_custom_call.1} parent=1 // pred_check
      _
    $region23: #{tpu_custom_call.1} parent=1 // pred_check_branch
      %121 = sbr.rel (0) target = $region25
    $region24: #{tpu_custom_call.1} parent=1 // pred_region
      %123 = dma.done [#allocation4], 128
    $region25: #{tpu_custom_call.1} parent=1 // pred_fallthru
      _
    %124 = vsyncpa [#allocation3], 1
    %125 = vsyncpa [#allocation6], 1
    %126 = vsyncpa [#allocation4], 1

</llo_original>
